<compile_context>
chip_gen: v5e
topology: v5e:2x2
jax: 0.10.0
libtpu: 0.0.40
codegen_flags: <defaults>
</compile_context>

<pallas_src>
import math

import jax
import jax.numpy as jnp
from jax.experimental import pallas as pl
from jax.experimental.pallas import tpu as pltpu


_PER_BUFFER_BYTES = 4 * 1024 * 1024    # target size of one x/out VMEM buffer
_VMEM_LIMIT_BYTES = 48 * 1024 * 1024   # explicit scoped-VMEM limit (v5e default is 16 MiB)


def create_positional_embedding(num_patches: int, embed_dim: int,
                                dtype=jnp.float32) -> jnp.ndarray:
    """Deterministic parameter init, mirroring the PyTorch __init__."""
    position = jnp.arange(num_patches, dtype=jnp.float32)[:, None]            # (P, 1)
    div_term = jnp.exp(
        jnp.arange(0, embed_dim, 2, dtype=jnp.float32)
        * -(math.log(10000.0) / embed_dim)
    )                                                                          # (E//2,)
    ang = position * div_term                                                  # (P, E//2)
    pos_emb = jnp.zeros((num_patches, embed_dim), dtype=jnp.float32)
    pos_emb = pos_emb.at[:, 0::2].set(jnp.sin(ang))
    pos_emb = pos_emb.at[:, 1::2].set(jnp.cos(ang))
    return pos_emb[None, :, :].astype(dtype)                                   # (1, P, E)


def _add_pos_kernel(x_ref, pe_ref, o_ref):
    # 3-D path: x_ref (B, ts, E), pe_ref (ts, E)  — pe broadcasts over batch.
    # 2-D path: x_ref (B, tc),    pe_ref (tc,)    — pe broadcasts over batch.
    o_ref[...] = (x_ref[...] + pe_ref[...]).astype(o_ref.dtype)


def _round_down(n: int, m: int) -> int:
    return (n // m) * m


def _seq_tile(B: int, S: int, E: int, itemsize: int, sublane: int) -> int:
    """Seq-tile rows so one (B, ts, E) buffer is ~<= 4 MiB; ts multiple of the
    sublane tile, or ts == S (full dim, always layout-legal)."""
    budget_rows = max(sublane, _PER_BUFFER_BYTES // max(1, B * E * itemsize))
    if S <= budget_rows:
        return S
    return max(sublane, _round_down(budget_rows, sublane))


def _col_tile(B: int, cols: int, itemsize: int) -> int:
    """Flattened-lane tile so one (B, tc) buffer is ~<= 4 MiB; tc multiple of
    128, or tc == cols (full dim)."""
    budget_cols = max(128, _PER_BUFFER_BYTES // max(1, B * itemsize))
    if cols <= budget_cols:
        return cols
    return max(128, _round_down(budget_cols, 128))


def sinusoidal_pos_embed_forward(x: jnp.ndarray, pos_emb: jnp.ndarray) -> jnp.ndarray:
    """x: (B, S, E); pos_emb: (1, num_patches, E) with num_patches >= S."""
    B, S, E = x.shape
    _, P, Epe = pos_emb.shape
    if Epe != E:
        raise ValueError(f"embed_dim mismatch: x has E={E}, pos_emb has E={Epe}")
    if S > P:
        raise ValueError(f"seq_len {S} exceeds num_patches {P}")

    # Single cast of the table to the activation dtype (see precision note above).
    pe = pos_emb.astype(x.dtype)

    itemsize = jnp.dtype(x.dtype).itemsize
    sublane = max(8, 32 // itemsize)          # 8 for f32, 16 for bf16, 32 for int8
    cparams = pltpu.CompilerParams(
        dimension_semantics=("parallel",),
        vmem_limit_bytes=_VMEM_LIMIT_BYTES,
    )

    if E % 128 == 0:
        # Lane-dense 3-D path: batch folded into the block, grid over seq tiles.
        # The [:, :seq_len, :] selection lives entirely in the pe index_map — the
        # full (1, P, E) table is passed, no host-side slice copy on the hot path.
        ts = _seq_tile(B, S, E, itemsize, sublane)
        grid = (pl.cdiv(S, ts),)
        return pl.pallas_call(
            _add_pos_kernel,
            out_shape=jax.ShapeDtypeStruct((B, S, E), x.dtype),
            grid=grid,
            in_specs=[
                pl.BlockSpec((B, ts, E), lambda s: (0, s, 0)),
                pl.BlockSpec((None, ts, E), lambda s: (0, s, 0)),
            ],
            out_specs=pl.BlockSpec((B, ts, E), lambda s: (0, s, 0)),
            input_output_aliases={0: 0},
            compiler_params=cparams,
        )(x, pe)

    # E not a multiple of 128: flatten (S, E) -> S*E onto the lane axis so stores
    # are unmasked (lane-dense out_spec). Slice + reshape of pe happens once in
    # the wrapper on this (small-E) path only.
    cols = S * E
    x2d = x.reshape(B, cols)
    pe2d = pe[:, :S, :].reshape(1, cols)
    tc = _col_tile(B, cols, itemsize)
    grid = (pl.cdiv(cols, tc),)
    out2d = pl.pallas_call(
        _add_pos_kernel,
        out_shape=jax.ShapeDtypeStruct((B, cols), x.dtype),
        grid=grid,
        in_specs=[
            pl.BlockSpec((B, tc), lambda c: (0, c)),
            pl.BlockSpec((None, tc), lambda c: (0, c)),
        ],
        out_specs=pl.BlockSpec((B, tc), lambda c: (0, c)),
        input_output_aliases={0: 0},
        compiler_params=cparams,
    )(x2d, pe2d)
    return out2d.reshape(B, S, E)


if __name__ == "__main__":
    # --- main test: lane-dense E (multiple of 128), f32, 3-D path ---
    num_patches = 16
    embed_dim = 128
    batch = 2
    seq_len = 8   # < num_patches: exercises the [:, :seq_len, :] selection via index_map

    pos_emb = create_positional_embedding(num_patches, embed_dim)
    key = jax.random.PRNGKey(0)
    x = jax.random.normal(key, (batch, seq_len, embed_dim), dtype=jnp.float32)

    # Reference computed before the kernel call (x is aliased into the output).
    ref = x + jnp.broadcast_to(pos_emb[:, :seq_len, :], x.shape)
    out = jax.block_until_ready(sinusoidal_pos_embed_forward(x, pos_emb))
    assert out.shape == (batch, seq_len, embed_dim)
    assert jnp.allclose(out, ref, atol=1e-6, rtol=1e-6)

    # --- secondary test: bf16 activations with small E=32 (lane-dense flattened path) ---
    embed_dim2 = 32
    pos_emb2 = create_positional_embedding(num_patches, embed_dim2)
    x2 = jax.random.normal(jax.random.PRNGKey(0),
                           (batch, seq_len, embed_dim2), dtype=jnp.bfloat16)
    ref2 = x2 + pos_emb2[:, :seq_len, :].astype(jnp.bfloat16)
    out2 = jax.block_until_ready(sinusoidal_pos_embed_forward(x2, pos_emb2))
    assert out2.dtype == jnp.bfloat16
    assert out2.shape == (batch, seq_len, embed_dim2)
    assert jnp.allclose(out2.astype(jnp.float32), ref2.astype(jnp.float32),
                        atol=1e-2, rtol=1e-2)

    print("KERNEL_OK")
</pallas_src>

<mosaic_0001>
module attributes {stable_mosaic.version = 11 : i64} {
  func.func @_add_pos_kernel(%arg0: i32, %arg1: memref<2x8x128xf32, #tpu.memory_space<vmem>>, %arg2: memref<1x8x128xf32, #tpu.memory_space<vmem>>, %arg3: memref<2x8x128xf32, #tpu.memory_space<vmem>>) attributes {dimension_semantics = [#tpu.dimension_semantics<parallel>], iteration_bounds = array<i64: 1>, scalar_prefetch = 0 : i64, scratch_operands = 0 : i64, tpu.core_type = #tpu.core_type<tc>, window_params = [{transform_indices = @transform_0, window_bounds = array<i64: 2, 8, 128>}, {transform_indices = @transform_1, window_bounds = array<i64: 1, 8, 128>}, {transform_indices = @transform_2, window_bounds = array<i64: 2, 8, 128>}]} {
    %c0 = arith.constant 0 : index
    %c0_0 = arith.constant 0 : index
    %c0_1 = arith.constant 0 : index
    %0 = vector.load %arg1[%c0, %c0_0, %c0_1] : memref<2x8x128xf32, #tpu.memory_space<vmem>>, vector<2x8x128xf32>
    %c0_2 = arith.constant 0 : index
    %c0_3 = arith.constant 0 : index
    %c0_4 = arith.constant 0 : index
    %1 = vector.load %arg2[%c0_2, %c0_3, %c0_4] : memref<1x8x128xf32, #tpu.memory_space<vmem>>, vector<1x8x128xf32>
    %2 = vector.shape_cast %1 : vector<1x8x128xf32> to vector<8x128xf32>
    %3 = vector.shape_cast %2 : vector<8x128xf32> to vector<1x8x128xf32>
    %4 = vector.broadcast %3 : vector<1x8x128xf32> to vector<2x8x128xf32>
    %5 = arith.addf %0, %4 : vector<2x8x128xf32>
    %c0_5 = arith.constant 0 : index
    %c0_6 = arith.constant 0 : index
    %c0_7 = arith.constant 0 : index
    %6 = vector.load %arg3[%c0_5, %c0_6, %c0_7] : memref<2x8x128xf32, #tpu.memory_space<vmem>>, vector<2x8x128xf32>
    tpu.vector_store %arg3[%c0_5, %c0_6, %c0_7], %5 {strides = array<i32>} : memref<2x8x128xf32, #tpu.memory_space<vmem>>, vector<2x8x128xf32>,
    return
  }
  func.func @transform_0(%arg0: i32) -> (i32, i32, i32) {
    %c0_i32 = arith.constant 0 : i32
    %c0_i32_0 = arith.constant 0 : i32
    %c0_i32_1 = arith.constant 0 : i32
    return %c0_i32, %arg0, %c0_i32_0 : i32, i32, i32
  }
  func.func @transform_1(%arg0: i32) -> (i32, i32, i32) {
    %c0_i32 = arith.constant 0 : i32
    %c0_i32_0 = arith.constant 0 : i32
    %c0_i32_1 = arith.constant 0 : i32
    return %c0_i32, %arg0, %c0_i32_0 : i32, i32, i32
  }
  func.func @transform_2(%arg0: i32) -> (i32, i32, i32) {
    %c0_i32 = arith.constant 0 : i32
    %c0_i32_0 = arith.constant 0 : i32
    %c0_i32_1 = arith.constant 0 : i32
    return %c0_i32, %arg0, %c0_i32_0 : i32, i32, i32
  }
}

</mosaic_0001>

<llo_original>
// kernel: tpu_custom_call.1
$region0: #{tpu_custom_call.1}
  #allocation0 [shape = 'u32[]', space=smem, size = 0x4, offset = 0x4, fixed_abs, tag = 'smem constant byte address 0x4 - core index']
  #allocation1 [shape = 'u32[72,128]{1,0:T(1,128)}', space=vmem, size = 0x9000, scoped, tag = 'internal scratch']
  %s0 = inlined_call_operand.hbm [shape: f32[2,8,128], index: 0, kind: input, shape index: {}, may-alias: {0,2}]
  %s1 = inlined_call_operand.vmem [shape: f32[1,16,128], index: 1, kind: input, shape index: {}]
  %s2 = inlined_call_operand.hbm [shape: f32[2,8,128], index: 2, kind: output, shape index: {}, may-alias: {0,2}]
  %s3 = sld [smem:[#allocation0]]
  $region22: #{tpu_custom_call.1} parent=0
    _
  %s5 = ssub.s32 1, %s3
  %s6 = scalar_select 0, %s5, %s3
  $region1: #{tpu_custom_call.1} parent=0
    #allocation2 [shape = 'u8[8192]{0}', space=vmem, size = 0x2000, scoped, tag = 'input window, operand 0, single buffered']
    #allocation3 [shape = 's32[1]{0}', space=sflag, size = 0x4, scoped, tag = 'scoped memory for tpu_custom_call.1']
    #allocation4 [shape = 's32[1]{0}', space=sflag, size = 0x4, scoped, tag = 'scoped memory for tpu_custom_call.1']
    #allocation5 [shape = 'u8[8192]{0}', space=vmem, size = 0x2000, scoped, tag = 'output window, operand 0, single buffered']
    %7 = vsyncpa [#allocation3], 0
    %8 = vsyncpa [#allocation4], 0
    // Predicated region
    $region2: #{tpu_custom_call.1} parent=1 // pred_check
      _
    $region3: #{tpu_custom_call.1} parent=1 // pred_check_branch
      %10 = sbr.rel (0) target = $region5
    $region4: #{tpu_custom_call.1} parent=1 // pred_region
      %12 = vsyncadd [#allocation3], 0
      %s13 = sshll.u32 %s0, 4
      %s14 = int_to_ptr.hbm [resolvable:$true] %s13
      %s15 = sshll.u32 [#allocation2], 4
      %s16 = int_to_ptr.vmem [resolvable:$true] %s15
      %21 = dma.hbm_to_vmem [thread:$0]  %s14, 256, %s16, [#allocation3], 128, 128, 8
    $region5: #{tpu_custom_call.1} parent=1 // pred_fallthru
      _
    // Predicated region
    $region6: #{tpu_custom_call.1} parent=1 // pred_check
      _
    $region7: #{tpu_custom_call.1} parent=1 // pred_check_branch
      %23 = sbr.rel (0) target = $region9
    $region8: #{tpu_custom_call.1} parent=1 // pred_region
      _
    $region9: #{tpu_custom_call.1} parent=1 // pred_fallthru
      _
    // Predicated region
    $region10: #{tpu_custom_call.1} parent=1 // pred_check
      _
    $region11: #{tpu_custom_call.1} parent=1 // pred_check_branch
      %25 = sbr.rel (0) target = $region13
    $region12: #{tpu_custom_call.1} parent=1 // pred_region
      %27 = dma.done [#allocation3], 256
    $region13: #{tpu_custom_call.1} parent=1 // pred_fallthru
      _
    %v28 = vld [vmem:[#allocation2] sm:$0xff]
    %v29 = vld [vmem:[#allocation2 + $0x8] sm:$0xff]
    %v30 = vld [vmem:[%s1] sm:$0xff]
    %v31 = vadd.f32 %v28, %v30
    %v32 = vadd.f32 %v29, %v30
    %33 = vst [vmem:[#allocation5] sm:$0xff] %v31
    %34 = vst [vmem:[#allocation5 + $0x8] sm:$0xff] %v32
    // Predicated region
    $region14: #{tpu_custom_call.1} parent=1 // pred_check
      _
    $region15: #{tpu_custom_call.1} parent=1 // pred_check_branch
      %36 = sbr.rel (0) target = $region17
    $region16: #{tpu_custom_call.1} parent=1 // pred_region
      %38 = vsyncadd [#allocation4], 0
      %s39 = sshll.u32 [#allocation5], 4
      %s40 = int_to_ptr.vmem [resolvable:$true] %s39
      %s41 = sshll.u32 %s2, 4
      %s42 = int_to_ptr.hbm [resolvable:$true] %s41
      %47 = dma.vmem_to_hbm [thread:$0]  %s40, 256, %s42, [#allocation4], 128, 128, 8
    $region17: #{tpu_custom_call.1} parent=1 // pred_fallthru
      _
    // Predicated region
    $region18: #{tpu_custom_call.1} parent=1 // pred_check
      _
    $region19: #{tpu_custom_call.1} parent=1 // pred_check_branch
      %49 = sbr.rel (0) target = $region21
    $region20: #{tpu_custom_call.1} parent=1 // pred_region
      %51 = dma.done [#allocation4], 256
    $region21: #{tpu_custom_call.1} parent=1 // pred_fallthru
      _
    %52 = vsyncpa [#allocation3], 1
    %53 = vsyncpa [#allocation4], 1

</llo_original>
